<compile_context>
chip_gen: v7x
topology: tpu7x:2x2x1
jax: 0.10.0
libtpu: 0.0.40
codegen_flags: <defaults>
</compile_context>

<pallas_src>
import functools
import math

import jax
import jax.numpy as jnp
from jax import lax
from jax.experimental import pallas as pl
from jax.experimental.pallas import tpu as pltpu

EPS = 1e-5                      # torch.nn.LayerNorm default
_INV_SQRT2 = 1.0 / math.sqrt(2.0)


def _round_up(a: int, m: int) -> int:
    return (a + m - 1) // m * m


def _vmem_capacity_bytes() -> int:
    """Per-TensorCore VMEM capacity; conservative 64 MiB (v7x) fallback."""
    try:
        info = pltpu.get_tpu_info()
        for attr in ("vmem_capacity_bytes", "vmem_bytes", "vmem_size_bytes"):
            v = getattr(info, attr, None)
            if v:
                return int(v)
    except Exception:
        pass
    return 64 * 1024 * 1024


def _pick_tn(e: int, tn_req: int):
    """Largest multiple of 128 that divides e and is <= tn_req (None if none)."""
    best = None
    t = 128
    lim = min(tn_req, e)
    while t <= lim:
        if e % t == 0:
            best = t
        t += 128
    return best


# ---------------------------------------------------------------------------
# Path A kernel: resident (E, E) weight, one row tile per grid step.
# ---------------------------------------------------------------------------
def _gpt_pred_kernel_resident(x_ref, w_ref, p_ref, o_ref, *, matmul_dtype):
    """x_ref: (TM, E). w_ref: (E_in, E_out) pre-transposed weight.
    p_ref: (8, E) packed [dense_b, ln1_g, ln1_b, ln2_g, ln2_b, pad...]."""
    x = x_ref[...].astype(jnp.float32)

    dense_b = p_ref[0:1, :]
    g1, b1 = p_ref[1:2, :], p_ref[2:3, :]
    g2, b2 = p_ref[3:4, :], p_ref[4:5, :]

    # LayerNorm 1 (two-pass, matches the reference numerics)
    mu = jnp.mean(x, axis=-1, keepdims=True)
    xc = x - mu
    var = jnp.mean(xc * xc, axis=-1, keepdims=True)
    xn = xc * lax.rsqrt(var + EPS) * g1 + b1

    # Dense: (TM, E) @ (E, E) with f32 accumulation on the MXU.
    h = jnp.dot(xn.astype(matmul_dtype), w_ref[...],
                preferred_element_type=jnp.float32) + dense_b

    # GELU (exact erf form, matching PyTorch)
    h = h * 0.5 * (1.0 + lax.erf(h * _INV_SQRT2))

    # LayerNorm 2 (two-pass)
    mu2 = jnp.mean(h, axis=-1, keepdims=True)
    hc = h - mu2
    var2 = jnp.mean(hc * hc, axis=-1, keepdims=True)
    o_ref[...] = (hc * lax.rsqrt(var2 + EPS) * g2 + b2).astype(o_ref.dtype)


# ---------------------------------------------------------------------------
# Path B kernel: weight streamed in (E, tn) column tiles, LN2 deferred to the
# last column step (two-pass over a VMEM-resident GELU scratch).
# ---------------------------------------------------------------------------
def _gpt_pred_kernel_stream(x_ref, w_ref, b_ref, p_ref, o_ref,
                            xn_sc, h_sc, *, inv_e, n_cols, tn):
    j = pl.program_id(1)

    @pl.when(j == 0)
    def _():
        x = x_ref[...].astype(jnp.float32)
        g1, b1 = p_ref[1:2, :], p_ref[2:3, :]
        mu = jnp.mean(x, axis=-1, keepdims=True)
        xc = x - mu
        var = jnp.mean(xc * xc, axis=-1, keepdims=True)
        xn_sc[...] = (xc * lax.rsqrt(var + EPS) * g1 + b1).astype(xn_sc.dtype)

    # One output-column tile: (TM, E) @ (E, tn), bias + GELU, park in scratch.
    h = jnp.dot(xn_sc[...], w_ref[...], preferred_element_type=jnp.float32)
    h = h + b_ref[...]
    h = h * 0.5 * (1.0 + lax.erf(h * _INV_SQRT2))
    h_sc[j] = h

    @pl.when(j == pl.num_programs(1) - 1)
    def _():
        # Deferred LayerNorm-2, two-pass over the VMEM-resident GELU output.
        s = jnp.sum(h_sc[0], axis=-1, keepdims=True)
        for jj in range(1, n_cols):                   # n_cols is a Python int
            s = s + jnp.sum(h_sc[jj], axis=-1, keepdims=True)
        mu2 = s * inv_e

        v = None
        for jj in range(n_cols):
            d = h_sc[jj] - mu2
            t = jnp.sum(d * d, axis=-1, keepdims=True)
            v = t if v is None else v + t
        rstd = lax.rsqrt(v * inv_e + EPS)

        for jj in range(n_cols):                      # static, lane-aligned slices
            g2 = p_ref[3:4, jj * tn:(jj + 1) * tn]
            b2 = p_ref[4:5, jj * tn:(jj + 1) * tn]
            hn = (h_sc[jj] - mu2) * rstd
            o_ref[:, jj * tn:(jj + 1) * tn] = (hn * g2 + b2).astype(o_ref.dtype)


# ---------------------------------------------------------------------------
# pallas_call builders
# ---------------------------------------------------------------------------
def _resident_spec(block_shape, index_map, single_buffer):
    if single_buffer:
        # Constant index_map -> a second pipeline buffer is pure VMEM waste.
        return pl.BlockSpec(block_shape, index_map, pipeline_mode=pl.Buffered(1))
    return pl.BlockSpec(block_shape, index_map)


def _call_resident(x2, w_t, pslab, *, rows_p, tm, E, matmul_dtype, out_dtype,
                   vmem_limit, single_buffer):
    grid = (rows_p // tm,)
    w_item = jnp.dtype(matmul_dtype).itemsize
    cost = pl.CostEstimate(
        flops=2 * rows_p * E * E,
        transcendentals=rows_p * E,
        bytes_accessed=rows_p * E * (x2.dtype.itemsize + jnp.dtype(out_dtype).itemsize)
        + E * E * w_item + 8 * E * 4,
    )
    return pl.pallas_call(
        functools.partial(_gpt_pred_kernel_resident, matmul_dtype=matmul_dtype),
        out_shape=jax.ShapeDtypeStruct((rows_p, E), out_dtype),
        grid_spec=pltpu.PrefetchScalarGridSpec(
            num_scalar_prefetch=0,
            grid=grid,
            in_specs=[
                pl.BlockSpec((tm, E), lambda i: (i, 0)),                    # x rows
                _resident_spec((E, E), lambda i: (0, 0), single_buffer),    # weight
                _resident_spec((8, E), lambda i: (0, 0), single_buffer),    # params
            ],
            out_specs=pl.BlockSpec((tm, E), lambda i: (i, 0)),
        ),
        compiler_params=pltpu.CompilerParams(
            dimension_semantics=("parallel",),
            vmem_limit_bytes=vmem_limit,
        ),
        cost_estimate=cost,
    )(x2, w_t, pslab)


def _call_stream(x2, w_t, b2d, pslab, *, rows_p, tm, tn, E, matmul_dtype,
                 out_dtype, vmem_limit, single_buffer):
    n_cols = E // tn
    grid = (rows_p // tm, n_cols)
    w_item = jnp.dtype(matmul_dtype).itemsize
    cost = pl.CostEstimate(
        flops=2 * rows_p * E * E,
        transcendentals=rows_p * E,
        bytes_accessed=rows_p * E * (x2.dtype.itemsize + jnp.dtype(out_dtype).itemsize)
        + (rows_p // tm) * E * E * w_item + 8 * E * 4,
    )
    return pl.pallas_call(
        functools.partial(_gpt_pred_kernel_stream,
                          inv_e=1.0 / E, n_cols=n_cols, tn=tn),
        out_shape=jax.ShapeDtypeStruct((rows_p, E), out_dtype),
        grid_spec=pltpu.PrefetchScalarGridSpec(
            num_scalar_prefetch=0,
            grid=grid,
            in_specs=[
                pl.BlockSpec((tm, E), lambda i, j: (i, 0)),                  # x rows
                pl.BlockSpec((E, tn), lambda i, j: (0, j)),                  # W columns
                pl.BlockSpec((1, tn), lambda i, j: (0, j)),                  # dense bias
                _resident_spec((8, E), lambda i, j: (0, 0), single_buffer),  # LN params
            ],
            out_specs=pl.BlockSpec((tm, E), lambda i, j: (i, 0)),
            scratch_shapes=[
                pltpu.VMEM((tm, E), matmul_dtype),           # LN1 output (matmul lhs)
                pltpu.VMEM((n_cols, tm, tn), jnp.float32),   # GELU output (pre-LN2)
            ],
        ),
        compiler_params=pltpu.CompilerParams(
            dimension_semantics=("parallel", "arbitrary"),
            vmem_limit_bytes=vmem_limit,
        ),
        cost_estimate=cost,
    )(x2, w_t, b2d, pslab)


# ---------------------------------------------------------------------------
# Wrapper
# ---------------------------------------------------------------------------
def gpt_prediction(
    x,
    params,
    *,
    tm: int = 512,
    tn: int = 512,
    matmul_dtype=jnp.bfloat16,
    out_dtype=None,
    force_stream_columns: bool = False,
    vmem_fraction: float = 0.75,
):
    """x: (B, S, E).  params: dense_w (E_out, E_in) torch Linear layout, dense_b,
    ln1_g/ln1_b/ln2_g/ln2_b all (E,).  Output dtype defaults to x.dtype (pass a
    bf16 x for bf16 I/O; LN statistics are always computed in f32)."""
    B, S, E = x.shape
    rows = B * S
    if out_dtype is None:
        out_dtype = x.dtype
    x2 = x.reshape(rows, E)

    x_item = x2.dtype.itemsize
    o_item = jnp.dtype(out_dtype).itemsize
    w_item = jnp.dtype(matmul_dtype).itemsize

    # One-time host transpose -> kernel runs a plain (TM,E)@(E,N) matmul; no
    # per-grid-step transpose of a resident weight tile.
    w_t = params["dense_w"].astype(matmul_dtype).T          # (E_in, E_out)

    zero = jnp.zeros((E,), jnp.float32)
    pslab = jnp.stack(
        [
            params["dense_b"].astype(jnp.float32),
            params["ln1_g"].astype(jnp.float32),
            params["ln1_b"].astype(jnp.float32),
            params["ln2_g"].astype(jnp.float32),
            params["ln2_b"].astype(jnp.float32),
            zero, zero, zero,
        ],
        axis=0,
    )

    cap = _vmem_capacity_bytes()
    budget = int(cap * vmem_fraction)

    # 16-row alignment when any 16-bit I/O is involved keeps tiles sublane-native.
    row_align = 8 if (x_item >= 4 and o_item >= 4) else 16

    def est_resident(t):
        # single-buffered resident weight/params, double-buffered row tiles,
        # ~4 (t, E) f32 temporaries for LN / GELU intermediates.
        return (2 * t * E * (x_item + o_item)
                + E * E * w_item + 8 * E * 4
                + 4 * t * E * 4)

    def est_stream(t, tn_):
        return (2 * t * E * (x_item + o_item)
                + 2 * E * tn_ * w_item + 2 * tn_ * 4 + 8 * E * 4
                + t * E * w_item                 # LN1 scratch
                + t * E * 4                      # GELU scratch
                + 2 * t * E * 4 + 3 * t * tn_ * 4)   # temporaries

    def shrink(t0, est_fn):
        t = max(row_align, _round_up(min(t0, _round_up(rows, row_align)), row_align))
        while t > row_align and est_fn(t) > budget:
            t = max(row_align, _round_up(t // 2, row_align))
        return t

    tn_eff = _pick_tn(E, tn)
    use_stream = force_stream_columns and tn_eff is not None
    tm_eff = shrink(tm, est_resident)
    if (not use_stream) and est_resident(tm_eff) > budget and tn_eff is not None:
        use_stream = True                        # resident weight does not fit VMEM
    if use_stream:
        tm_eff = shrink(tm, lambda t: est_stream(t, tn_eff))
        est = est_stream(tm_eff, tn_eff)
    else:
        est = est_resident(tm_eff)
    # TODO(synk): if even the streamed path exceeds the budget at tm=row_align
    # (extremely large E), additionally tile the contraction dimension.

    rows_p = _round_up(rows, tm_eff)
    # v7x has 2 TensorCores: keep the "parallel" row axis >= 2 steps when possible.
    while rows_p // tm_eff < 2 and tm_eff > row_align:
        tm_eff = max(row_align, _round_up(tm_eff // 2, row_align))
        rows_p = _round_up(rows, tm_eff)

    if rows_p != rows:
        x2 = jnp.pad(x2, ((0, rows_p - rows), (0, 0)))

    vmem_limit = int(min(cap * 7 // 8, max(int(est * 1.25) + (4 << 20), 32 << 20)))

    common = dict(rows_p=rows_p, E=E, matmul_dtype=matmul_dtype,
                  out_dtype=out_dtype, vmem_limit=vmem_limit)

    def run(single_buffer):
        if use_stream:
            b2d = params["dense_b"].astype(jnp.float32).reshape(1, E)
            return _call_stream(x2, w_t, b2d, pslab, tm=tm_eff, tn=tn_eff,
                                single_buffer=single_buffer, **common)
        return _call_resident(x2, w_t, pslab, tm=tm_eff,
                              single_buffer=single_buffer, **common)

    try:
        out = run(True)
    except Exception:
        # pipeline_mode=pl.Buffered(1) unsupported on this JAX version ->
        # fall back to default double-buffered resident operands.
        out = run(False)

    return out[:rows].reshape(B, S, E)


# ---------------------------------------------------------------------------
# Pure-JAX reference of the PyTorch forward
# ---------------------------------------------------------------------------
def _reference(x, params):
    def ln(v, g, b):
        mu = jnp.mean(v, axis=-1, keepdims=True)
        var = jnp.mean((v - mu) ** 2, axis=-1, keepdims=True)
        return (v - mu) / jnp.sqrt(var + EPS) * g + b

    h = ln(x, params["ln1_g"], params["ln1_b"])
    h = jnp.matmul(h, params["dense_w"].T,
                   precision=lax.Precision.HIGHEST) + params["dense_b"]
    h = h * 0.5 * (1.0 + lax.erf(h / math.sqrt(2.0)))
    return ln(h, params["ln2_g"], params["ln2_b"])


if __name__ == "__main__":
    key = jax.random.PRNGKey(0)

    def make_params(k, E):
        kw, kb, k1, k2, k3, k4 = jax.random.split(k, 6)
        return {
            "dense_w": jax.random.normal(kw, (E, E), jnp.float32) * (1.0 / math.sqrt(E)),
            "dense_b": jax.random.normal(kb, (E,), jnp.float32) * 0.02,
            "ln1_g": 1.0 + 0.05 * jax.random.normal(k1, (E,), jnp.float32),
            "ln1_b": 0.05 * jax.random.normal(k2, (E,), jnp.float32),
            "ln2_g": 1.0 + 0.05 * jax.random.normal(k3, (E,), jnp.float32),
            "ln2_b": 0.05 * jax.random.normal(k4, (E,), jnp.float32),
        }

    # --- small demo shape, resident-weight path ---
    B, S, E = 2, 8, 32
    kx, kp, kxs, kps = jax.random.split(key, 4)
    x = jax.random.normal(kx, (B, S, E), dtype=jnp.float32)
    params = make_params(kp, E)
    ref = _reference(x, params)

    # Exact path (f32 I/O, f32 matmul operands)
    out_f32 = jax.block_until_ready(gpt_prediction(x, params, matmul_dtype=jnp.float32))
    assert out_f32.shape == (B, S, E)
    err = float(jnp.max(jnp.abs(out_f32 - ref)))
    assert err < 5e-4, err

    # Fast path: bf16 I/O + bf16 matmul operands, f32 LN statistics
    out_bf = jax.block_until_ready(
        gpt_prediction(x.astype(jnp.bfloat16), params, matmul_dtype=jnp.bfloat16))
    assert out_bf.shape == (B, S, E) and out_bf.dtype == jnp.bfloat16
    err = float(jnp.max(jnp.abs(out_bf.astype(jnp.float32) - ref)))
    assert err < 1e-1, err

    # --- streamed-weight / deferred-LN2 path (used when the (E,E) weight no
    #     longer fits VMEM; forced here at a small shape to validate it) ---
    B2, S2, E2 = 2, 8, 256
    x_s = jax.random.normal(kxs, (B2, S2, E2), dtype=jnp.float32)
    params_s = make_params(kps, E2)
    ref_s = _reference(x_s, params_s)

    out_s = jax.block_until_ready(
        gpt_prediction(x_s, params_s, matmul_dtype=jnp.float32,
                       force_stream_columns=True, tn=128))
    assert out_s.shape == (B2, S2, E2)
    err = float(jnp.max(jnp.abs(out_s - ref_s)))
    assert err < 5e-4, err

    out_sb = jax.block_until_ready(
        gpt_prediction(x_s.astype(jnp.bfloat16), params_s, matmul_dtype=jnp.bfloat16,
                       force_stream_columns=True, tn=128))
    err = float(jnp.max(jnp.abs(out_sb.astype(jnp.float32) - ref_s)))
    assert err < 1e-1, err

    print("KERNEL_OK")
</pallas_src>

<mosaic_0001>
module attributes {stable_mosaic.version = 11 : i64} {
  func.func @_gpt_pred_kernel_resident(%arg0: i32, %arg1: memref<8x32xf32, #tpu.memory_space<vmem>>, %arg2: memref<32x32xf32, #tpu.memory_space<vmem>>, %arg3: memref<8x32xf32, #tpu.memory_space<vmem>>, %arg4: memref<8x32xf32, #tpu.memory_space<vmem>>) attributes {dimension_semantics = [#tpu.dimension_semantics<parallel>], iteration_bounds = array<i64: 2>, scalar_prefetch = 0 : i64, scratch_operands = 0 : i64, tpu.core_type = #tpu.core_type<tc>, window_params = [{transform_indices = @transform_0, window_bounds = array<i64: 8, 32>}, {pipeline_mode = #tpu.pipeline_mode<synchronous>, transform_indices = @transform_1, window_bounds = array<i64: 32, 32>}, {pipeline_mode = #tpu.pipeline_mode<synchronous>, transform_indices = @transform_2, window_bounds = array<i64: 8, 32>}, {transform_indices = @transform_3, window_bounds = array<i64: 8, 32>}]} {
    %c0 = arith.constant 0 : index
    %c0_0 = arith.constant 0 : index
    %0 = vector.load %arg1[%c0, %c0_0] : memref<8x32xf32, #tpu.memory_space<vmem>>, vector<8x32xf32>
    %c0_1 = arith.constant 0 : index
    %c0_2 = arith.constant 0 : index
    %1 = vector.load %arg3[%c0_1, %c0_2] : memref<8x32xf32, #tpu.memory_space<vmem>>, vector<1x32xf32>
    %c1 = arith.constant 1 : index
    %c0_3 = arith.constant 0 : index
    %2 = vector.load %arg3[%c1, %c0_3] : memref<8x32xf32, #tpu.memory_space<vmem>>, vector<1x32xf32>
    %c2 = arith.constant 2 : index
    %c0_4 = arith.constant 0 : index
    %3 = vector.load %arg3[%c2, %c0_4] : memref<8x32xf32, #tpu.memory_space<vmem>>, vector<1x32xf32>
    %c3 = arith.constant 3 : index
    %c0_5 = arith.constant 0 : index
    %4 = vector.load %arg3[%c3, %c0_5] : memref<8x32xf32, #tpu.memory_space<vmem>>, vector<1x32xf32>
    %c4 = arith.constant 4 : index
    %c0_6 = arith.constant 0 : index
    %5 = vector.load %arg3[%c4, %c0_6] : memref<8x32xf32, #tpu.memory_space<vmem>>, vector<1x32xf32>
    %cst = arith.constant dense<0.000000e+00> : vector<8xf32>
    %6 = vector.multi_reduction <add>, %0, %cst [1] : vector<8x32xf32> to vector<8xf32>
    %7 = vector.shape_cast %6 : vector<8xf32> to vector<8x1xf32>
    %cst_7 = arith.constant 3.200000e+01 : f32
    %8 = vector.broadcast %cst_7 : f32 to vector<8x1xf32>
    %9 = arith.divf %7, %8 : vector<8x1xf32>
    %10 = vector.broadcast %9 : vector<8x1xf32> to vector<8x32xf32>
    %11 = arith.subf %0, %10 : vector<8x32xf32>
    %12 = arith.mulf %11, %11 : vector<8x32xf32>
    %cst_8 = arith.constant dense<0.000000e+00> : vector<8xf32>
    %13 = vector.multi_reduction <add>, %12, %cst_8 [1] : vector<8x32xf32> to vector<8xf32>
    %14 = vector.shape_cast %13 : vector<8xf32> to vector<8x1xf32>
    %cst_9 = arith.constant 3.200000e+01 : f32
    %15 = vector.broadcast %cst_9 : f32 to vector<8x1xf32>
    %16 = arith.divf %14, %15 : vector<8x1xf32>
    %cst_10 = arith.constant 9.99999974E-6 : f32
    %17 = vector.broadcast %cst_10 : f32 to vector<8x1xf32>
    %18 = arith.addf %16, %17 : vector<8x1xf32>
    %19 = math.rsqrt %18 : vector<8x1xf32>
    %20 = vector.broadcast %19 : vector<8x1xf32> to vector<8x32xf32>
    %21 = arith.mulf %11, %20 : vector<8x32xf32>
    %22 = vector.broadcast %2 : vector<1x32xf32> to vector<8x32xf32>
    %23 = arith.mulf %21, %22 : vector<8x32xf32>
    %24 = vector.broadcast %3 : vector<1x32xf32> to vector<8x32xf32>
    %25 = arith.addf %23, %24 : vector<8x32xf32>
    %c0_11 = arith.constant 0 : index
    %c0_12 = arith.constant 0 : index
    %26 = vector.load %arg2[%c0_11, %c0_12] : memref<32x32xf32, #tpu.memory_space<vmem>>, vector<32x32xf32>
    %cst_13 = arith.constant dense<0.000000e+00> : vector<8x32xf32>
    %27 = tpu.matmul %25, %26, %cst_13 {dimension_numbers = #tpu.dot_dimension_numbers<[1], [0], [0], [1], [0, 0, 1, 1], [], []>} : vector<8x32xf32>, vector<32x32xf32>, vector<8x32xf32> -> vector<8x32xf32>
    %28 = vector.broadcast %1 : vector<1x32xf32> to vector<8x32xf32>
    %29 = arith.addf %27, %28 : vector<8x32xf32>
    %cst_14 = arith.constant 5.000000e-01 : f32
    %30 = vector.broadcast %cst_14 : f32 to vector<8x32xf32>
    %31 = arith.mulf %29, %30 : vector<8x32xf32>
    %cst_15 = arith.constant 0.707106769 : f32
    %32 = vector.broadcast %cst_15 : f32 to vector<8x32xf32>
    %33 = arith.mulf %29, %32 : vector<8x32xf32>
    %34 = math.erf %33 : vector<8x32xf32>
    %cst_16 = arith.constant 1.000000e+00 : f32
    %35 = vector.broadcast %cst_16 : f32 to vector<8x32xf32>
    %36 = arith.addf %35, %34 : vector<8x32xf32>
    %37 = arith.mulf %31, %36 : vector<8x32xf32>
    %cst_17 = arith.constant dense<0.000000e+00> : vector<8xf32>
    %38 = vector.multi_reduction <add>, %37, %cst_17 [1] : vector<8x32xf32> to vector<8xf32>
    %39 = vector.shape_cast %38 : vector<8xf32> to vector<8x1xf32>
    %cst_18 = arith.constant 3.200000e+01 : f32
    %40 = vector.broadcast %cst_18 : f32 to vector<8x1xf32>
    %41 = arith.divf %39, %40 : vector<8x1xf32>
    %42 = vector.broadcast %41 : vector<8x1xf32> to vector<8x32xf32>
    %43 = arith.subf %37, %42 : vector<8x32xf32>
    %44 = arith.mulf %43, %43 : vector<8x32xf32>
    %cst_19 = arith.constant dense<0.000000e+00> : vector<8xf32>
    %45 = vector.multi_reduction <add>, %44, %cst_19 [1] : vector<8x32xf32> to vector<8xf32>
    %46 = vector.shape_cast %45 : vector<8xf32> to vector<8x1xf32>
    %cst_20 = arith.constant 3.200000e+01 : f32
    %47 = vector.broadcast %cst_20 : f32 to vector<8x1xf32>
    %48 = arith.divf %46, %47 : vector<8x1xf32>
    %cst_21 = arith.constant 9.99999974E-6 : f32
    %49 = vector.broadcast %cst_21 : f32 to vector<8x1xf32>
    %50 = arith.addf %48, %49 : vector<8x1xf32>
    %51 = math.rsqrt %50 : vector<8x1xf32>
    %52 = vector.broadcast %51 : vector<8x1xf32> to vector<8x32xf32>
    %53 = arith.mulf %43, %52 : vector<8x32xf32>
    %54 = vector.broadcast %4 : vector<1x32xf32> to vector<8x32xf32>
    %55 = arith.mulf %53, %54 : vector<8x32xf32>
    %56 = vector.broadcast %5 : vector<1x32xf32> to vector<8x32xf32>
    %57 = arith.addf %55, %56 : vector<8x32xf32>
    %c0_22 = arith.constant 0 : index
    %c0_23 = arith.constant 0 : index
    %58 = vector.load %arg4[%c0_22, %c0_23] : memref<8x32xf32, #tpu.memory_space<vmem>>, vector<8x32xf32>
    tpu.vector_store %arg4[%c0_22, %c0_23], %57 {strides = array<i32>} : memref<8x32xf32, #tpu.memory_space<vmem>>, vector<8x32xf32>,
    return
  }
  func.func @transform_0(%arg0: i32) -> (i32, i32) {
    %c0_i32 = arith.constant 0 : i32
    %c0_i32_0 = arith.constant 0 : i32
    return %arg0, %c0_i32 : i32, i32
  }
  func.func @transform_1(%arg0: i32) -> (i32, i32) {
    %c0_i32 = arith.constant 0 : i32
    %c0_i32_0 = arith.constant 0 : i32
    %c0_i32_1 = arith.constant 0 : i32
    return %c0_i32, %c0_i32_0 : i32, i32
  }
  func.func @transform_2(%arg0: i32) -> (i32, i32) {
    %c0_i32 = arith.constant 0 : i32
    %c0_i32_0 = arith.constant 0 : i32
    %c0_i32_1 = arith.constant 0 : i32
    return %c0_i32, %c0_i32_0 : i32, i32
  }
  func.func @transform_3(%arg0: i32) -> (i32, i32) {
    %c0_i32 = arith.constant 0 : i32
    %c0_i32_0 = arith.constant 0 : i32
    return %arg0, %c0_i32 : i32, i32
  }
}

module attributes {stable_mosaic.version = 11 : i64} {
  func.func @_gpt_pred_kernel_resident(%arg0: i32, %arg1: memref<8x32xf32, #tpu.memory_space<vmem>>, %arg2: memref<32x32xf32, #tpu.memory_space<vmem>>, %arg3: memref<8x32xf32, #tpu.memory_space<vmem>>, %arg4: memref<8x32xf32, #tpu.memory_space<vmem>>) attributes {dimension_semantics = [#tpu.dimension_semantics<parallel>], iteration_bounds = array<i64: 2>, scalar_prefetch = 0 : i64, scratch_operands = 0 : i64, tpu.core_type = #tpu.core_type<tc>, window_params = [{transform_indices = @transform_0, window_bounds = array<i64: 8, 32>}, {pipeline_mode = #tpu.pipeline_mode<synchronous>, transform_indices = @transform_1, window_bounds = array<i64: 32, 32>}, {pipeline_mode = #tpu.pipeline_mode<synchronous>, transform_indices = @transform_2, window_bounds = array<i64: 8, 32>}, {transform_indices = @transform_3, window_bounds = array<i64: 8, 32>}]} {
    %c0 = arith.constant 0 : index
    %c0_0 = arith.constant 0 : index
    %0 = vector.load %arg1[%c0, %c0_0] : memref<8x32xf32, #tpu.memory_space<vmem>>, vector<8x32xf32>
    %c0_1 = arith.constant 0 : index
    %c0_2 = arith.constant 0 : index
    %1 = vector.load %arg3[%c0_1, %c0_2] : memref<8x32xf32, #tpu.memory_space<vmem>>, vector<1x32xf32>
    %c1 = arith.constant 1 : index
    %c0_3 = arith.constant 0 : index
    %2 = vector.load %arg3[%c1, %c0_3] : memref<8x32xf32, #tpu.memory_space<vmem>>, vector<1x32xf32>
    %c2 = arith.constant 2 : index
    %c0_4 = arith.constant 0 : index
    %3 = vector.load %arg3[%c2, %c0_4] : memref<8x32xf32, #tpu.memory_space<vmem>>, vector<1x32xf32>
    %c3 = arith.constant 3 : index
    %c0_5 = arith.constant 0 : index
    %4 = vector.load %arg3[%c3, %c0_5] : memref<8x32xf32, #tpu.memory_space<vmem>>, vector<1x32xf32>
    %c4 = arith.constant 4 : index
    %c0_6 = arith.constant 0 : index
    %5 = vector.load %arg3[%c4, %c0_6] : memref<8x32xf32, #tpu.memory_space<vmem>>, vector<1x32xf32>
    %cst = arith.constant dense<0.000000e+00> : vector<8xf32>
    %6 = vector.multi_reduction <add>, %0, %cst [1] : vector<8x32xf32> to vector<8xf32>
    %7 = vector.shape_cast %6 : vector<8xf32> to vector<8x1xf32>
    %cst_7 = arith.constant 3.200000e+01 : f32
    %8 = vector.broadcast %cst_7 : f32 to vector<8x1xf32>
    %9 = arith.divf %7, %8 : vector<8x1xf32>
    %10 = vector.broadcast %9 : vector<8x1xf32> to vector<8x32xf32>
    %11 = arith.subf %0, %10 : vector<8x32xf32>
    %12 = arith.mulf %11, %11 : vector<8x32xf32>
    %cst_8 = arith.constant dense<0.000000e+00> : vector<8xf32>
    %13 = vector.multi_reduction <add>, %12, %cst_8 [1] : vector<8x32xf32> to vector<8xf32>
    %14 = vector.shape_cast %13 : vector<8xf32> to vector<8x1xf32>
    %cst_9 = arith.constant 3.200000e+01 : f32
    %15 = vector.broadcast %cst_9 : f32 to vector<8x1xf32>
    %16 = arith.divf %14, %15 : vector<8x1xf32>
    %cst_10 = arith.constant 9.99999974E-6 : f32
    %17 = vector.broadcast %cst_10 : f32 to vector<8x1xf32>
    %18 = arith.addf %16, %17 : vector<8x1xf32>
    %19 = math.rsqrt %18 : vector<8x1xf32>
    %20 = vector.broadcast %19 : vector<8x1xf32> to vector<8x32xf32>
    %21 = arith.mulf %11, %20 : vector<8x32xf32>
    %22 = vector.broadcast %2 : vector<1x32xf32> to vector<8x32xf32>
    %23 = arith.mulf %21, %22 : vector<8x32xf32>
    %24 = vector.broadcast %3 : vector<1x32xf32> to vector<8x32xf32>
    %25 = arith.addf %23, %24 : vector<8x32xf32>
    %c0_11 = arith.constant 0 : index
    %c0_12 = arith.constant 0 : index
    %26 = vector.load %arg2[%c0_11, %c0_12] : memref<32x32xf32, #tpu.memory_space<vmem>>, vector<32x32xf32>
    %cst_13 = arith.constant dense<0.000000e+00> : vector<8x32xf32>
    %27 = tpu.matmul %25, %26, %cst_13 {dimension_numbers = #tpu.dot_dimension_numbers<[1], [0], [0], [1], [0, 0, 1, 1], [], []>} : vector<8x32xf32>, vector<32x32xf32>, vector<8x32xf32> -> vector<8x32xf32>
    %28 = vector.broadcast %1 : vector<1x32xf32> to vector<8x32xf32>
    %29 = arith.addf %27, %28 : vector<8x32xf32>
    %cst_14 = arith.constant 5.000000e-01 : f32
    %30 = vector.broadcast %cst_14 : f32 to vector<8x32xf32>
    %31 = arith.mulf %29, %30 : vector<8x32xf32>
    %cst_15 = arith.constant 0.707106769 : f32
    %32 = vector.broadcast %cst_15 : f32 to vector<8x32xf32>
    %33 = arith.mulf %29, %32 : vector<8x32xf32>
    %34 = math.erf %33 : vector<8x32xf32>
    %cst_16 = arith.constant 1.000000e+00 : f32
    %35 = vector.broadcast %cst_16 : f32 to vector<8x32xf32>
    %36 = arith.addf %35, %34 : vector<8x32xf32>
    %37 = arith.mulf %31, %36 : vector<8x32xf32>
    %cst_17 = arith.constant dense<0.000000e+00> : vector<8xf32>
    %38 = vector.multi_reduction <add>, %37, %cst_17 [1] : vector<8x32xf32> to vector<8xf32>
    %39 = vector.shape_cast %38 : vector<8xf32> to vector<8x1xf32>
    %cst_18 = arith.constant 3.200000e+01 : f32
    %40 = vector.broadcast %cst_18 : f32 to vector<8x1xf32>
    %41 = arith.divf %39, %40 : vector<8x1xf32>
    %42 = vector.broadcast %41 : vector<8x1xf32> to vector<8x32xf32>
    %43 = arith.subf %37, %42 : vector<8x32xf32>
    %44 = arith.mulf %43, %43 : vector<8x32xf32>
    %cst_19 = arith.constant dense<0.000000e+00> : vector<8xf32>
    %45 = vector.multi_reduction <add>, %44, %cst_19 [1] : vector<8x32xf32> to vector<8xf32>
    %46 = vector.shape_cast %45 : vector<8xf32> to vector<8x1xf32>
    %cst_20 = arith.constant 3.200000e+01 : f32
    %47 = vector.broadcast %cst_20 : f32 to vector<8x1xf32>
    %48 = arith.divf %46, %47 : vector<8x1xf32>
    %cst_21 = arith.constant 9.99999974E-6 : f32
    %49 = vector.broadcast %cst_21 : f32 to vector<8x1xf32>
    %50 = arith.addf %48, %49 : vector<8x1xf32>
    %51 = math.rsqrt %50 : vector<8x1xf32>
    %52 = vector.broadcast %51 : vector<8x1xf32> to vector<8x32xf32>
    %53 = arith.mulf %43, %52 : vector<8x32xf32>
    %54 = vector.broadcast %4 : vector<1x32xf32> to vector<8x32xf32>
    %55 = arith.mulf %53, %54 : vector<8x32xf32>
    %56 = vector.broadcast %5 : vector<1x32xf32> to vector<8x32xf32>
    %57 = arith.addf %55, %56 : vector<8x32xf32>
    %c0_22 = arith.constant 0 : index
    %c0_23 = arith.constant 0 : index
    %58 = vector.load %arg4[%c0_22, %c0_23] : memref<8x32xf32, #tpu.memory_space<vmem>>, vector<8x32xf32>
    tpu.vector_store %arg4[%c0_22, %c0_23], %57 {strides = array<i32>} : memref<8x32xf32, #tpu.memory_space<vmem>>, vector<8x32xf32>,
    return
  }
  func.func @transform_0(%arg0: i32) -> (i32, i32) {
    %c0_i32 = arith.constant 0 : i32
    %c0_i32_0 = arith.constant 0 : i32
    return %arg0, %c0_i32 : i32, i32
  }
  func.func @transform_1(%arg0: i32) -> (i32, i32) {
    %c0_i32 = arith.constant 0 : i32
    %c0_i32_0 = arith.constant 0 : i32
    %c0_i32_1 = arith.constant 0 : i32
    return %c0_i32, %c0_i32_0 : i32, i32
  }
  func.func @transform_2(%arg0: i32) -> (i32, i32) {
    %c0_i32 = arith.constant 0 : i32
    %c0_i32_0 = arith.constant 0 : i32
    %c0_i32_1 = arith.constant 0 : i32
    return %c0_i32, %c0_i32_0 : i32, i32
  }
  func.func @transform_3(%arg0: i32) -> (i32, i32) {
    %c0_i32 = arith.constant 0 : i32
    %c0_i32_0 = arith.constant 0 : i32
    return %arg0, %c0_i32 : i32, i32
  }
}

</mosaic_0001>

<llo_original>
// kernel: tpu_custom_call.1
$region0: #{tpu_custom_call.1}
  #allocation0 [shape = 'u32[]', space=smem, size = 0x4, offset = 0x4, fixed_abs, tag = 'smem constant byte address 0x4 - core index']
  #allocation1 [shape = 'u32[144,128]{1,0:T(1,128)}', space=vmem, size = 0x12000, scoped, tag = 'internal scratch']
  %s0 = inlined_call_operand.hbm [shape: f32[16,32], index: 0, kind: input, shape index: {}]
  %s1 = inlined_call_operand.hbm [shape: f32[32,32], index: 1, kind: input, shape index: {}]
  %s2 = inlined_call_operand.hbm [shape: f32[8,32], index: 2, kind: input, shape index: {}]
  %s3 = inlined_call_operand.hbm [shape: f32[16,32], index: 3, kind: output, shape index: {}]
  %s4 = sld [smem:[#allocation0]]
  $region57: #{tpu_custom_call.1} parent=0
    _
  %s6 = ssub.s32 1, %s4
  %s7 = scalar_select 0, %s6, %s4
  $region1: #{tpu_custom_call.1} parent=0
    #allocation2 [shape = 'u8[8192]{0}', space=vmem, size = 0x2000, scoped, tag = 'input window, operand 0']
    #allocation3 [shape = 's32[2]{0}', space=sflag, size = 0x8, scoped, tag = 'scoped memory for tpu_custom_call.1']
    #allocation4 [shape = 's32[2]{0}', space=sflag, size = 0x8, scoped, tag = 'scoped memory for tpu_custom_call.1']
    #allocation5 [shape = 'u8[16384]{0}', space=vmem, size = 0x4000, scoped, tag = 'input window, operand 1, single buffered']
    #allocation6 [shape = 's32[1]{0}', space=sflag, size = 0x4, scoped, tag = 'scoped memory for tpu_custom_call.1']
    #allocation7 [shape = 'u8[4096]{0}', space=vmem, size = 0x1000, scoped, tag = 'input window, operand 2, single buffered']
    #allocation8 [shape = 'u8[8192]{0}', space=vmem, size = 0x2000, scoped, tag = 'output window, operand 0']
    %8 = vsyncpa [#allocation3], 0
    %s9 = scalar_lea.sflag [#allocation3], 1
    %10 = vsyncpa %s9, 0
    %11 = vsyncpa [#allocation6], 0
    %12 = vsyncpa [#allocation4], 0
    %s13 = scalar_lea.sflag [#allocation4], 1
    %14 = vsyncpa %s13, 0
    loop: start=0, step=1, limit=4
    $region2: #{tpu_custom_call.1} parent=1 // loop_pre_header
      _
    $region3: #{tpu_custom_call.1} parent=1 // loop_header
      %s16 = sphi 0, %s20
      %p17 = scmp.ge.s32.totalorder %s16, 4
      %s26 = sphi 0, %s28
      %s29 = sphi 0, %s26
      %s30 = sphi 0, %s29
      %s46 = sphi 0, %s30
      %s50 = sphi 0, %s50
      %s52 = sphi 0, %s50
      %s53 = sphi 0, %s52
      %s67 = sphi 0, %s53
      %s71 = sphi 0, %s71
      %s73 = sphi 0, %s71
      %s74 = sphi 0, %s73
      %s88 = sphi 0, %s74
      %s94 = sphi 0, %s96
      %s97 = sphi 0, %s94
      %s98 = sphi 0, %s97
      %s114 = sphi 0, %s98
    $region4: #{tpu_custom_call.1} parent=1 // loop_header_branch
      %19 = sbr.rel (%p17) target = $region8
    $region5: #{tpu_custom_call.1} parent=1 // loop_body
      %s21 = ssub.s32 %s16, 1
      %s22 = ssub.s32 %s16, 2
      %s23 = sadd.s32 %s16, 1
      %s24 = ssub.s32 %s16, %s23
      %p25 = scmp.eq.s32.totalorder %s24, 0
      %s27 = sadd.s32 %s26, 1
      %s28 = scalar_select %p25, %s26, %s27
      %p31 = pneg %p25
      %p32 = scmp.eq.s32.totalorder %s16, 1
      %p33 = por %p31, %p32
      %p34 = scmp.ne.s32.totalorder %s26, %s29
      %p35 = scmp.eq.s32.totalorder %s16, 0
      %p36 = por %p34, %p35
      %p37 = scmp.ne.s32.totalorder %s26, %s29
      %p38 = scmp.eq.s32.totalorder %s21, 1
      %p39 = por %p37, %p38
      %p40 = scmp.ne.s32.totalorder %s29, %s30
      %p41 = scmp.eq.s32.totalorder %s21, 0
      %p42 = por %p40, %p41
      %p43 = scmp.ne.s32.totalorder %s29, %s30
      %p44 = scmp.eq.s32.totalorder %s22, 1
      %p45 = por %p43, %p44
      %p47 = scmp.ne.s32.totalorder %s30, %s46
      %p48 = scmp.eq.s32.totalorder %s22, 0
      %p49 = por %p47, %p48
      %s51 = sadd.s32 %s50, 1
      %p54 = scmp.eq.s32.totalorder %s16, 1
      %p55 = scmp.ne.s32.totalorder %s50, %s52
      %p56 = scmp.eq.s32.totalorder %s16, 0
      %p57 = por %p55, %p56
      %p58 = scmp.ne.s32.totalorder %s50, %s52
      %p59 = scmp.eq.s32.totalorder %s21, 1
      %p60 = por %p58, %p59
      %p61 = scmp.ne.s32.totalorder %s52, %s53
      %p62 = scmp.eq.s32.totalorder %s21, 0
      %p63 = por %p61, %p62
      %p64 = scmp.ne.s32.totalorder %s52, %s53
      %p65 = scmp.eq.s32.totalorder %s22, 1
      %p66 = por %p64, %p65
      %p68 = scmp.ne.s32.totalorder %s53, %s67
      %p69 = scmp.eq.s32.totalorder %s22, 0
      %p70 = por %p68, %p69
      %s72 = sadd.s32 %s71, 1
      %p75 = scmp.eq.s32.totalorder %s16, 1
      %p76 = scmp.ne.s32.totalorder %s71, %s73
      %p77 = scmp.eq.s32.totalorder %s16, 0
      %p78 = por %p76, %p77
      %p79 = scmp.ne.s32.totalorder %s71, %s73
      %p80 = scmp.eq.s32.totalorder %s21, 1
      %p81 = por %p79, %p80
      %p82 = scmp.ne.s32.totalorder %s73, %s74
      %p83 = scmp.eq.s32.totalorder %s21, 0
      %p84 = por %p82, %p83
      %p85 = scmp.ne.s32.totalorder %s73, %s74
      %p86 = scmp.eq.s32.totalorder %s22, 1
      %p87 = por %p85, %p86
      %p89 = scmp.ne.s32.totalorder %s74, %s88
      %p90 = scmp.eq.s32.totalorder %s22, 0
      %p91 = por %p89, %p90
      %s92 = ssub.s32 %s16, %s23
      %p93 = scmp.eq.s32.totalorder %s92, 0
      %s95 = sadd.s32 %s94, 1
      %s96 = scalar_select %p93, %s94, %s95
      %p99 = pneg %p93
      %p100 = scmp.eq.s32.totalorder %s16, 1
      %p101 = por %p99, %p100
      %p102 = scmp.ne.s32.totalorder %s94, %s97
      %p103 = scmp.eq.s32.totalorder %s16, 0
      %p104 = por %p102, %p103
      %p105 = scmp.ne.s32.totalorder %s94, %s97
      %p106 = scmp.eq.s32.totalorder %s21, 1
      %p107 = por %p105, %p106
      %p108 = scmp.ne.s32.totalorder %s97, %s98
      %p109 = scmp.eq.s32.totalorder %s21, 0
      %p110 = por %p108, %p109
      %p111 = scmp.ne.s32.totalorder %s97, %s98
      %p112 = scmp.eq.s32.totalorder %s22, 1
      %p113 = por %p111, %p112
      %p115 = scmp.ne.s32.totalorder %s98, %s114
      %p116 = scmp.eq.s32.totalorder %s22, 0
      %p117 = por %p115, %p116
      %p118 = scmp.le.s32.totalorder 1, %s16
      %p119 = scmp.lt.s32.totalorder %s16, 3
      %p120 = pnand %p118, %p119
      %p121 = pneg %p120
      // Predicated region
      $region9: #{tpu_custom_call.1} parent=5 // pred_check
        _
      $region10: #{tpu_custom_call.1} parent=5 // pred_check_branch
        %123 = sbr.rel (%p120) target = $region12
      $region11: #{tpu_custom_call.1} parent=5 // pred_region
        %s124 = ssub.s32 %s16, 1
        // Predicated region
        $region13: #{tpu_custom_call.1} parent=11 // pred_check
          %p125 = pneg %p63
        $region14: #{tpu_custom_call.1} parent=11 // pred_check_branch
          %127 = sbr.rel (%p125) target = $region16
        $region15: #{tpu_custom_call.1} parent=11 // pred_region
          %s129 = ssub.s32 512, 512
          %130 = vsyncadd [#allocation6], %s129
          %s131 = sshll.u32 [#allocation5], 4
          %s132 = int_to_ptr.vmem [resolvable:$true] %s131
          %137 = dma.hbm_to_vmem [thread:$0]  %s1, 512, %s132, [#allocation6], 128, 128, 8
        $region16: #{tpu_custom_call.1} parent=11 // pred_fallthru
          _
        // Predicated region
        $region17: #{tpu_custom_call.1} parent=11 // pred_check
          %p138 = pneg %p84
        $region18: #{tpu_custom_call.1} parent=11 // pred_check_branch
          %140 = sbr.rel (%p138) target = $region20
        $region19: #{tpu_custom_call.1} parent=11 // pred_region
          %s142 = ssub.s32 128, 128
          %143 = vsyncadd [#allocation6], %s142
          %s145 = sshll.u32 [#allocation7], 4
          %s146 = int_to_ptr.vmem [resolvable:$true] %s145
          %148 = dma.hbm_to_vmem [thread:$0]  %s2, 128, %s146, [#allocation6]
        $region20: #{tpu_custom_call.1} parent=11 // pred_fallthru
          _
      $region12: #{tpu_custom_call.1} parent=5 // pred_fallthru
        _
      %p149 = scmp.lt.s32.totalorder %s16, 2
      // Predicated region
      $region21: #{tpu_custom_call.1} parent=5 // pred_check
        %p150 = pneg %p149
      $region22: #{tpu_custom_call.1} parent=5 // pred_check_branch
        %152 = sbr.rel (%p150) target = $region24
      $region23: #{tpu_custom_call.1} parent=5 // pred_region
        // Predicated region
        $region25: #{tpu_custom_call.1} parent=23 // pred_check
          %p153 = pneg %p36
        $region26: #{tpu_custom_call.1} parent=23 // pred_check_branch
          %155 = sbr.rel (%p153) target = $region28
        $region27: #{tpu_custom_call.1} parent=23 // pred_region
          %s156 = sand.u32 %s26, 1
          %s157 = scalar_lea.sflag [#allocation3], %s156
          %s158 = sand.u32 %s26, 1
          %s159 = smul.addr %s158, 8
          %s160 = scalar_lea.vmem [#allocation2], %s159
          %s162 = ssub.s32 128, 128
          %163 = vsyncadd %s157, %s162
          %s164 = smul.addr %s16, 128
          %s165 = scalar_lea.hbm %s0, %s164
          %s167 = sshll.u32 %s160, 4
          %s168 = int_to_ptr.vmem [resolvable:$true] %s167
          %170 = dma.hbm_to_vmem [thread:$0]  %s165, 128, %s168, %s157
        $region28: #{tpu_custom_call.1} parent=23 // pred_fallthru
          _
      $region24: #{tpu_custom_call.1} parent=5 // pred_fallthru
        _
      %p171 = scmp.le.s32.totalorder 1, %s16
      %p172 = scmp.lt.s32.totalorder %s16, 3
      %p173 = pnand %p171, %p172
      %p174 = pneg %p173
      // Predicated region
      $region29: #{tpu_custom_call.1} parent=5 // pred_check
        _
      $region30: #{tpu_custom_call.1} parent=5 // pred_check_branch
        %176 = sbr.rel (%p173) target = $region32
      $region31: #{tpu_custom_call.1} parent=5 // pred_region
        %s177 = ssub.s32 %s16, 1
        %s178 = sand.u32 %s29, 1
        %s179 = scalar_lea.sflag [#allocation3], %s178
        %s180 = sand.u32 %s29, 1
        %s181 = smul.addr %s180, 8
        %s182 = scalar_lea.vmem [#allocation2], %s181
        // Predicated region
        $region33: #{tpu_custom_call.1} parent=31 // pred_check
          %p183 = pneg %p42
        $region34: #{tpu_custom_call.1} parent=31 // pred_check_branch
          %185 = sbr.rel (%p183) target = $region36
        $region35: #{tpu_custom_call.1} parent=31 // pred_region
          %186 = dma.done %s179, 128
        $region36: #{tpu_custom_call.1} parent=31 // pred_fallthru
          _
        // Predicated region
        $region37: #{tpu_custom_call.1} parent=31 // pred_check
          %p187 = pneg %p63
        $region38: #{tpu_custom_call.1} parent=31 // pred_check_branch
          %189 = sbr.rel (%p187) target = $region40
        $region39: #{tpu_custom_call.1} parent=31 // pred_region
          %190 = dma.done [#allocation6], 512
        $region40: #{tpu_custom_call.1} parent=31 // pred_fallthru
          _
        // Predicated region
        $region41: #{tpu_custom_call.1} parent=31 // pred_check
          %p191 = pneg %p84
        $region42: #{tpu_custom_call.1} parent=31 // pred_check_branch
          %193 = sbr.rel (%p191) target = $region44
        $region43: #{tpu_custom_call.1} parent=31 // pred_region
          %194 = dma.done [#allocation6], 128
        $region44: #{tpu_custom_call.1} parent=31 // pred_fallthru
          _
        %s195 = sand.u32 %s29, 1
        %s196 = scalar_lea.sflag [#allocation3], %s195
        %s197 = sand.u32 %s29, 1
        %s198 = smul.addr %s197, 8
        %s199 = scalar_lea.vmem [#allocation2], %s198
        %p200 = pneg %p42
        %p201 = pneg %p39
        %p202 = pneg %p63
        %p203 = pneg %p60
        %p204 = pneg %p84
        %p205 = pneg %p81
        %p206 = pneg %p110
        %p207 = pneg %p107
        %s208 = sand.u32 %s97, 1
        %s209 = scalar_lea.sflag [#allocation4], %s208
        %s210 = sand.u32 %s97, 1
        %s211 = smul.addr %s210, 8
        %s212 = scalar_lea.vmem [#allocation8], %s211
        %v213 = vld [vmem:[%s182] sm:$0xff]
        %v214 = vld [vmem:[#allocation7] sm:$0x1]
        %v215 = vld [vmem:[#allocation7 + $0x1] sm:$0x1]
        %v216 = vld [vmem:[#allocation7 + $0x2] sm:$0x1]
        %v217 = vld [vmem:[#allocation7 + $0x3] sm:$0x1]
        %v218 = vld [vmem:[#allocation7 + $0x4] sm:$0x1]
        %vm219 = vcmask 261120
        %v220 = vsel %vm219, %v213, 0.0
        %221 = vadd.xlane.f32.xlu0 %v220
        %v222 = vpop.xlane.xlu0 %221
        %v223 = vrcp.pop 32.0
        %v224 = vmul.f32 %v222, %v223
        %v225 = vsub.f32 %v213, %v224
        %v226 = vmul.f32 %v225, %v225
        %v227 = vsel %vm219, %v226, 0.0
        %228 = vadd.xlane.f32.xlu0 %v227
        %v229 = vpop.xlane.xlu0 %228
        %v230 = vmul.f32 %v229, %v223
        %v231 = vadd.f32 %v230, 1e-05
        %v232 = vrsqrt.pop %v231
        %v233 = vmul.f32 %v225, %v232
        %v234 = vlaneseq
        %v235 = vshrl.u32 %v234, 7
        %v236 = vsub.s32 0, %v235
        %v237 = vrot.slane %v215, %v236
        %v238 = vmul.f32 %v233, %v237
        %v239 = vlaneseq
        %v240 = vshrl.u32 %v239, 7
        %v241 = vsub.s32 0, %v240
        %v242 = vrot.slane %v216, %v241
        %v243 = vadd.f32 %v238, %v242
        %v244 = vld [vmem:[#allocation5] sm:$0xff]
        %v245 = vld [vmem:[#allocation5 + $0x8] sm:$0xff]
        %v246 = vld [vmem:[#allocation5 + $0x10] sm:$0xff]
        %v247 = vld [vmem:[#allocation5 + $0x18] sm:$0xff]
        %v248 = vlaneseq
        %v249 = vshrl.u32 %v248, 7
        %v250 = vsub.s32 0, %v249
        %v251 = vrot.slane %v214, %v250
        %v253 = vsel %vm219, %v243, 0
        %255 = vmatprep.subr.mxu0 0.0
        %256 = vmatpush1.msra.mxu0 %v244
        %257 = vmatprep.subr.mxu0 0.0
        %258 = vmatpush1.msra.mxu0 %v245
        %259 = vmatprep.subr.mxu0 0.0
        %260 = vmatpush1.msra.mxu0 %v246
        %261 = vmatprep.subr.mxu0 0.0
        %262 = vmatpush1.msra.mxu0 %v247
        %263 = vmatprep.subr.mxu0 0.0
        %264 = vmatpush1.msra.mxu0 0.0
        %265 = vmatprep.subr.mxu0 0.0
        %266 = vmatpush1.msra.mxu0 0.0
        %267 = vmatprep.subr.mxu0 0.0
        %268 = vmatpush1.msra.mxu0 0.0
        %269 = vmatprep.subr.mxu0 0.0
        %270 = vmatpush1.msra.mxu0 0.0
        %271 = vmatprep.subr.mxu0 0.0
        %272 = vmatpush1.msra.mxu0 0.0
        %273 = vmatprep.subr.mxu0 0.0
        %274 = vmatpush1.msra.mxu0 0.0
        %275 = vmatprep.subr.mxu0 0.0
        %276 = vmatpush1.msra.mxu0 0.0
        %277 = vmatprep.subr.mxu0 0.0
        %278 = vmatpush1.msra.mxu0 0.0
        %279 = vmatprep.subr.mxu0 0.0
        %280 = vmatpush1.msra.mxu0 0.0
        %281 = vmatprep.subr.mxu0 0.0
        %282 = vmatpush1.msra.mxu0 0.0
        %283 = vmatprep.subr.mxu0 0.0
        %284 = vmatpush1.msra.mxu0 0.0
        %285 = vmatprep.subr.mxu0 0.0
        %286 = vmatpush1.msra.mxu0 0.0
        %287 = vmatprep.subr.mxu0 0.0
        %288 = vmatpush1.msra.mxu0 0.0
        %289 = vmatprep.subr.mxu0 0.0
        %290 = vmatpush1.msra.mxu0 0.0
        %291 = vmatprep.subr.mxu0 0.0
        %292 = vmatpush1.msra.mxu0 0.0
        %293 = vmatprep.subr.mxu0 0.0
        %294 = vmatpush1.msra.mxu0 0.0
        %295 = vmatprep.subr.mxu0 0.0
        %296 = vmatpush1.msra.mxu0 0.0
        %297 = vmatprep.subr.mxu0 0.0
        %298 = vmatpush1.msra.mxu0 0.0
        %299 = vmatprep.subr.mxu0 0.0
        %300 = vmatpush1.msra.mxu0 0.0
        %301 = vmatprep.subr.mxu0 0.0
        %302 = vmatpush1.msra.mxu0 0.0
        %303 = vmatprep.subr.mxu0 0.0
        %304 = vmatpush1.msra.mxu0 0.0
        %305 = vmatprep.subr.mxu0 0.0
        %306 = vmatpush1.msra.mxu0 0.0
        %307 = vmatprep.subr.mxu0 0.0
        %308 = vmatpush1.msra.mxu0 0.0
        %309 = vmatprep.subr.mxu0 0.0
        %310 = vmatpush1.msra.mxu0 0.0
        %311 = vmatprep.subr.mxu0 0.0
        %312 = vmatpush1.msra.mxu0 0.0
        %313 = vmatprep.subr.mxu0 0.0
        %314 = vmatpush1.msra.mxu0 0.0
        %315 = vmatprep.subr.mxu0 0.0
        %316 = vmatpush1.msra.mxu0 0.0
        %317 = vmatprep.subr.mxu0 0.0
        %318 = vmatpush1.msra.mxu0 0.0
        %319 = vmatprep.mubr.f32.mxu0 0.0
        %320 = vmatmul.mubr.f32.gmra.mrb[0].mxu0 %v253
        %v321 = vpop.f32.mrb[0].mxu0
        %v322 = vadd.f32 %v251, %v321
        %v323 = vpop.f32.mrb[0].mxu0
        %324 = vdwg.mxu0
        %v325 = vmul.f32 %v322, 0.5
        %v326 = vmul.f32 %v322, 0.70710677
        %v327 = verf.f32.pop %v326
        %v328 = vadd.f32 %v327, 1.0
        %v329 = vmul.f32 %v325, %v328
        %v330 = vsel %vm219, %v329, 0.0
        %331 = vadd.xlane.f32.xlu0 %v330
        %v332 = vpop.xlane.xlu0 %331
        %v333 = vmul.f32 %v332, %v223
        %v334 = vsub.f32 %v329, %v333
        %v335 = vmul.f32 %v334, %v334
        %v336 = vsel %vm219, %v335, 0.0
        %337 = vadd.xlane.f32.xlu0 %v336
        %v338 = vpop.xlane.xlu0 %337
        %v339 = vmul.f32 %v338, %v223
        %v340 = vadd.f32 %v339, 1e-05
        %v341 = vrsqrt.pop %v340
        %v342 = vmul.f32 %v334, %v341
        %v343 = vlaneseq
        %v344 = vshrl.u32 %v343, 7
        %v345 = vsub.s32 0, %v344
        %v346 = vrot.slane %v217, %v345
        %v347 = vmul.f32 %v342, %v346
        %v348 = vlaneseq
        %v349 = vshrl.u32 %v348, 7
        %v350 = vsub.s32 0, %v349
        %v351 = vrot.slane %v218, %v350
        %v352 = vadd.f32 %v347, %v351
        %353 = vst.msk [vmem:[%s212] sm:$0xff] %vm219, %v352
        %s354 = sand.u32 %s97, 1
        %s355 = scalar_lea.sflag [#allocation4], %s354
        %s356 = sand.u32 %s97, 1
        %s357 = smul.addr %s356, 8
        %s358 = scalar_lea.vmem [#allocation8], %s357
        // Predicated region
        $region45: #{tpu_custom_call.1} parent=31 // pred_check
          %p359 = pneg %p107
        $region46: #{tpu_custom_call.1} parent=31 // pred_check_branch
          %361 = sbr.rel (%p359) target = $region48
        $region47: #{tpu_custom_call.1} parent=31 // pred_region
          %s363 = ssub.s32 128, 128
          %364 = vsyncadd %s355, %s363
          %s365 = smul.addr %s21, 128
          %s366 = scalar_lea.hbm %s3, %s365
          %s368 = sshll.u32 %s358, 4
          %s369 = int_to_ptr.vmem [resolvable:$true] %s368
          %371 = dma.vmem_to_hbm [thread:$0]  %s369, 128, %s366, %s355
        $region48: #{tpu_custom_call.1} parent=31 // pred_fallthru
          _
      $region32: #{tpu_custom_call.1} parent=5 // pred_fallthru
        _
      %p372 = scmp.le.s32.totalorder 2, %s16
      // Predicated region
      $region49: #{tpu_custom_call.1} parent=5 // pred_check
        %p373 = pneg %p372
      $region50: #{tpu_custom_call.1} parent=5 // pred_check_branch
        %375 = sbr.rel (%p373) target = $region52
      $region51: #{tpu_custom_call.1} parent=5 // pred_region
        %s376 = ssub.s32 %s16, 2
        // Predicated region
        $region53: #{tpu_custom_call.1} parent=51 // pred_check
          %p377 = pneg %p113
        $region54: #{tpu_custom_call.1} parent=51 // pred_check_branch
          %379 = sbr.rel (%p377) target = $region56
        $region55: #{tpu_custom_call.1} parent=51 // pred_region
          %s380 = sand.u32 %s98, 1
          %s381 = scalar_lea.sflag [#allocation4], %s380
          %s382 = sand.u32 %s98, 1
          %s383 = smul.addr %s382, 8
          %s384 = scalar_lea.vmem [#allocation8], %s383
          %385 = dma.done %s381, 128
        $region56: #{tpu_custom_call.1} parent=51 // pred_fallthru
          _
      $region52: #{tpu_custom_call.1} parent=5 // pred_fallthru
        _
    $region6: #{tpu_custom_call.1} parent=1 // loop_footer
      %s20 = sadd.s32 1, %s16
    $region7: #{tpu_custom_call.1} parent=1 // loop_footer_branch
      %15 = sbr.rel target = $region3
    $region8: #{tpu_custom_call.1} parent=1 // loop_exit
      _
    %386 = vsyncpa [#allocation3], 1
    %s387 = scalar_lea.sflag [#allocation3], 1
    %388 = vsyncpa %s387, 1
    %389 = vsyncpa [#allocation6], 1
    %390 = vsyncpa [#allocation4], 1
    %s391 = scalar_lea.sflag [#allocation4], 1
    %392 = vsyncpa %s391, 1

// kernel: tpu_custom_call.1
$region0: #{tpu_custom_call.1}
  #allocation0 [shape = 'u32[]', space=smem, size = 0x4, offset = 0x4, fixed_abs, tag = 'smem constant byte address 0x4 - core index']
  #allocation1 [shape = 'u32[144,128]{1,0:T(1,128)}', space=vmem, size = 0x12000, scoped, tag = 'internal scratch']
  %s0 = inlined_call_operand.hbm [shape: f32[16,32], index: 0, kind: input, shape index: {}]
  %s1 = inlined_call_operand.hbm [shape: f32[32,32], index: 1, kind: input, shape index: {}]
  %s2 = inlined_call_operand.hbm [shape: f32[8,32], index: 2, kind: input, shape index: {}]
  %s3 = inlined_call_operand.hbm [shape: f32[16,32], index: 3, kind: output, shape index: {}]
  %s4 = sld [smem:[#allocation0]]
  $region57: #{tpu_custom_call.1} parent=0
    _
  %s6 = ssub.s32 1, %s4
  %s7 = scalar_select 0, %s6, %s4
  $region1: #{tpu_custom_call.1} parent=0
    #allocation2 [shape = 'u8[8192]{0}', space=vmem, size = 0x2000, scoped, tag = 'input window, operand 0']
    #allocation3 [shape = 's32[2]{0}', space=sflag, size = 0x8, scoped, tag = 'scoped memory for tpu_custom_call.1']
    #allocation4 [shape = 's32[2]{0}', space=sflag, size = 0x8, scoped, tag = 'scoped memory for tpu_custom_call.1']
    #allocation5 [shape = 'u8[16384]{0}', space=vmem, size = 0x4000, scoped, tag = 'input window, operand 1, single buffered']
    #allocation6 [shape = 's32[1]{0}', space=sflag, size = 0x4, scoped, tag = 'scoped memory for tpu_custom_call.1']
    #allocation7 [shape = 'u8[4096]{0}', space=vmem, size = 0x1000, scoped, tag = 'input window, operand 2, single buffered']
    #allocation8 [shape = 'u8[8192]{0}', space=vmem, size = 0x2000, scoped, tag = 'output window, operand 0']
    %8 = vsyncpa [#allocation3], 0
    %s9 = scalar_lea.sflag [#allocation3], 1
    %10 = vsyncpa %s9, 0
    %11 = vsyncpa [#allocation6], 0
    %12 = vsyncpa [#allocation4], 0
    %s13 = scalar_lea.sflag [#allocation4], 1
    %14 = vsyncpa %s13, 0
    loop: start=0, step=1, limit=4
    $region2: #{tpu_custom_call.1} parent=1 // loop_pre_header
      _
    $region3: #{tpu_custom_call.1} parent=1 // loop_header
      %s16 = sphi 0, %s20
      %p17 = scmp.ge.s32.totalorder %s16, 4
      %s26 = sphi 0, %s28
      %s29 = sphi 0, %s26
      %s30 = sphi 0, %s29
      %s46 = sphi 0, %s30
      %s50 = sphi 0, %s50
      %s52 = sphi 0, %s50
      %s53 = sphi 0, %s52
      %s67 = sphi 0, %s53
      %s71 = sphi 0, %s71
      %s73 = sphi 0, %s71
      %s74 = sphi 0, %s73
      %s88 = sphi 0, %s74
      %s94 = sphi 0, %s96
      %s97 = sphi 0, %s94
      %s98 = sphi 0, %s97
      %s114 = sphi 0, %s98
    $region4: #{tpu_custom_call.1} parent=1 // loop_header_branch
      %19 = sbr.rel (%p17) target = $region8
    $region5: #{tpu_custom_call.1} parent=1 // loop_body
      %s21 = ssub.s32 %s16, 1
      %s22 = ssub.s32 %s16, 2
      %s23 = sadd.s32 %s16, 1
      %s24 = ssub.s32 %s16, %s23
      %p25 = scmp.eq.s32.totalorder %s24, 0
      %s27 = sadd.s32 %s26, 1
      %s28 = scalar_select %p25, %s26, %s27
      %p31 = pneg %p25
      %p32 = scmp.eq.s32.totalorder %s16, 1
      %p33 = por %p31, %p32
      %p34 = scmp.ne.s32.totalorder %s26, %s29
      %p35 = scmp.eq.s32.totalorder %s16, 0
      %p36 = por %p34, %p35
      %p37 = scmp.ne.s32.totalorder %s26, %s29
      %p38 = scmp.eq.s32.totalorder %s21, 1
      %p39 = por %p37, %p38
      %p40 = scmp.ne.s32.totalorder %s29, %s30
      %p41 = scmp.eq.s32.totalorder %s21, 0
      %p42 = por %p40, %p41
      %p43 = scmp.ne.s32.totalorder %s29, %s30
      %p44 = scmp.eq.s32.totalorder %s22, 1
      %p45 = por %p43, %p44
      %p47 = scmp.ne.s32.totalorder %s30, %s46
      %p48 = scmp.eq.s32.totalorder %s22, 0
      %p49 = por %p47, %p48
      %s51 = sadd.s32 %s50, 1
      %p54 = scmp.eq.s32.totalorder %s16, 1
      %p55 = scmp.ne.s32.totalorder %s50, %s52
      %p56 = scmp.eq.s32.totalorder %s16, 0
      %p57 = por %p55, %p56
      %p58 = scmp.ne.s32.totalorder %s50, %s52
      %p59 = scmp.eq.s32.totalorder %s21, 1
      %p60 = por %p58, %p59
      %p61 = scmp.ne.s32.totalorder %s52, %s53
      %p62 = scmp.eq.s32.totalorder %s21, 0
      %p63 = por %p61, %p62
      %p64 = scmp.ne.s32.totalorder %s52, %s53
      %p65 = scmp.eq.s32.totalorder %s22, 1
      %p66 = por %p64, %p65
      %p68 = scmp.ne.s32.totalorder %s53, %s67
      %p69 = scmp.eq.s32.totalorder %s22, 0
      %p70 = por %p68, %p69
      %s72 = sadd.s32 %s71, 1
      %p75 = scmp.eq.s32.totalorder %s16, 1
      %p76 = scmp.ne.s32.totalorder %s71, %s73
      %p77 = scmp.eq.s32.totalorder %s16, 0
      %p78 = por %p76, %p77
      %p79 = scmp.ne.s32.totalorder %s71, %s73
      %p80 = scmp.eq.s32.totalorder %s21, 1
      %p81 = por %p79, %p80
      %p82 = scmp.ne.s32.totalorder %s73, %s74
      %p83 = scmp.eq.s32.totalorder %s21, 0
      %p84 = por %p82, %p83
      %p85 = scmp.ne.s32.totalorder %s73, %s74
      %p86 = scmp.eq.s32.totalorder %s22, 1
      %p87 = por %p85, %p86
      %p89 = scmp.ne.s32.totalorder %s74, %s88
      %p90 = scmp.eq.s32.totalorder %s22, 0
      %p91 = por %p89, %p90
      %s92 = ssub.s32 %s16, %s23
      %p93 = scmp.eq.s32.totalorder %s92, 0
      %s95 = sadd.s32 %s94, 1
      %s96 = scalar_select %p93, %s94, %s95
      %p99 = pneg %p93
      %p100 = scmp.eq.s32.totalorder %s16, 1
      %p101 = por %p99, %p100
      %p102 = scmp.ne.s32.totalorder %s94, %s97
      %p103 = scmp.eq.s32.totalorder %s16, 0
      %p104 = por %p102, %p103
      %p105 = scmp.ne.s32.totalorder %s94, %s97
      %p106 = scmp.eq.s32.totalorder %s21, 1
      %p107 = por %p105, %p106
      %p108 = scmp.ne.s32.totalorder %s97, %s98
      %p109 = scmp.eq.s32.totalorder %s21, 0
      %p110 = por %p108, %p109
      %p111 = scmp.ne.s32.totalorder %s97, %s98
      %p112 = scmp.eq.s32.totalorder %s22, 1
      %p113 = por %p111, %p112
      %p115 = scmp.ne.s32.totalorder %s98, %s114
      %p116 = scmp.eq.s32.totalorder %s22, 0
      %p117 = por %p115, %p116
      %p118 = scmp.le.s32.totalorder 1, %s16
      %p119 = scmp.lt.s32.totalorder %s16, 3
      %p120 = pnand %p118, %p119
      %p121 = pneg %p120
      // Predicated region
      $region9: #{tpu_custom_call.1} parent=5 // pred_check
        _
      $region10: #{tpu_custom_call.1} parent=5 // pred_check_branch
        %123 = sbr.rel (%p120) target = $region12
      $region11: #{tpu_custom_call.1} parent=5 // pred_region
        %s124 = ssub.s32 %s16, 1
        // Predicated region
        $region13: #{tpu_custom_call.1} parent=11 // pred_check
          %p125 = pneg %p63
        $region14: #{tpu_custom_call.1} parent=11 // pred_check_branch
          %127 = sbr.rel (%p125) target = $region16
        $region15: #{tpu_custom_call.1} parent=11 // pred_region
          %s129 = ssub.s32 512, 512
          %130 = vsyncadd [#allocation6], %s129
          %s131 = sshll.u32 [#allocation5], 4
          %s132 = int_to_ptr.vmem [resolvable:$true] %s131
          %137 = dma.hbm_to_vmem [thread:$0]  %s1, 512, %s132, [#allocation6], 128, 128, 8
        $region16: #{tpu_custom_call.1} parent=11 // pred_fallthru
          _
        // Predicated region
        $region17: #{tpu_custom_call.1} parent=11 // pred_check
          %p138 = pneg %p84
        $region18: #{tpu_custom_call.1} parent=11 // pred_check_branch
          %140 = sbr.rel (%p138) target = $region20
        $region19: #{tpu_custom_call.1} parent=11 // pred_region
          %s142 = ssub.s32 128, 128
          %143 = vsyncadd [#allocation6], %s142
          %s145 = sshll.u32 [#allocation7], 4
          %s146 = int_to_ptr.vmem [resolvable:$true] %s145
          %148 = dma.hbm_to_vmem [thread:$0]  %s2, 128, %s146, [#allocation6]
        $region20: #{tpu_custom_call.1} parent=11 // pred_fallthru
          _
      $region12: #{tpu_custom_call.1} parent=5 // pred_fallthru
        _
      %p149 = scmp.lt.s32.totalorder %s16, 2
      // Predicated region
      $region21: #{tpu_custom_call.1} parent=5 // pred_check
        %p150 = pneg %p149
      $region22: #{tpu_custom_call.1} parent=5 // pred_check_branch
        %152 = sbr.rel (%p150) target = $region24
      $region23: #{tpu_custom_call.1} parent=5 // pred_region
        // Predicated region
        $region25: #{tpu_custom_call.1} parent=23 // pred_check
          %p153 = pneg %p36
        $region26: #{tpu_custom_call.1} parent=23 // pred_check_branch
          %155 = sbr.rel (%p153) target = $region28
        $region27: #{tpu_custom_call.1} parent=23 // pred_region
          %s156 = sand.u32 %s26, 1
          %s157 = scalar_lea.sflag [#allocation3], %s156
          %s158 = sand.u32 %s26, 1
          %s159 = smul.addr %s158, 8
          %s160 = scalar_lea.vmem [#allocation2], %s159
          %s162 = ssub.s32 128, 128
          %163 = vsyncadd %s157, %s162
          %s164 = smul.addr %s16, 128
          %s165 = scalar_lea.hbm %s0, %s164
          %s167 = sshll.u32 %s160, 4
          %s168 = int_to_ptr.vmem [resolvable:$true] %s167
          %170 = dma.hbm_to_vmem [thread:$0]  %s165, 128, %s168, %s157
        $region28: #{tpu_custom_call.1} parent=23 // pred_fallthru
          _
      $region24: #{tpu_custom_call.1} parent=5 // pred_fallthru
        _
      %p171 = scmp.le.s32.totalorder 1, %s16
      %p172 = scmp.lt.s32.totalorder %s16, 3
      %p173 = pnand %p171, %p172
      %p174 = pneg %p173
      // Predicated region
      $region29: #{tpu_custom_call.1} parent=5 // pred_check
        _
      $region30: #{tpu_custom_call.1} parent=5 // pred_check_branch
        %176 = sbr.rel (%p173) target = $region32
      $region31: #{tpu_custom_call.1} parent=5 // pred_region
        %s177 = ssub.s32 %s16, 1
        %s178 = sand.u32 %s29, 1
        %s179 = scalar_lea.sflag [#allocation3], %s178
        %s180 = sand.u32 %s29, 1
        %s181 = smul.addr %s180, 8
        %s182 = scalar_lea.vmem [#allocation2], %s181
        // Predicated region
        $region33: #{tpu_custom_call.1} parent=31 // pred_check
          %p183 = pneg %p42
        $region34: #{tpu_custom_call.1} parent=31 // pred_check_branch
          %185 = sbr.rel (%p183) target = $region36
        $region35: #{tpu_custom_call.1} parent=31 // pred_region
          %186 = dma.done %s179, 128
        $region36: #{tpu_custom_call.1} parent=31 // pred_fallthru
          _
        // Predicated region
        $region37: #{tpu_custom_call.1} parent=31 // pred_check
          %p187 = pneg %p63
        $region38: #{tpu_custom_call.1} parent=31 // pred_check_branch
          %189 = sbr.rel (%p187) target = $region40
        $region39: #{tpu_custom_call.1} parent=31 // pred_region
          %190 = dma.done [#allocation6], 512
        $region40: #{tpu_custom_call.1} parent=31 // pred_fallthru
          _
        // Predicated region
        $region41: #{tpu_custom_call.1} parent=31 // pred_check
          %p191 = pneg %p84
        $region42: #{tpu_custom_call.1} parent=31 // pred_check_branch
          %193 = sbr.rel (%p191) target = $region44
        $region43: #{tpu_custom_call.1} parent=31 // pred_region
          %194 = dma.done [#allocation6], 128
        $region44: #{tpu_custom_call.1} parent=31 // pred_fallthru
          _
        %s195 = sand.u32 %s29, 1
        %s196 = scalar_lea.sflag [#allocation3], %s195
        %s197 = sand.u32 %s29, 1
        %s198 = smul.addr %s197, 8
        %s199 = scalar_lea.vmem [#allocation2], %s198
        %p200 = pneg %p42
        %p201 = pneg %p39
        %p202 = pneg %p63
        %p203 = pneg %p60
        %p204 = pneg %p84
        %p205 = pneg %p81
        %p206 = pneg %p110
        %p207 = pneg %p107
        %s208 = sand.u32 %s97, 1
        %s209 = scalar_lea.sflag [#allocation4], %s208
        %s210 = sand.u32 %s97, 1
        %s211 = smul.addr %s210, 8
        %s212 = scalar_lea.vmem [#allocation8], %s211
        %v213 = vld [vmem:[%s182] sm:$0xff]
        %v214 = vld [vmem:[#allocation7] sm:$0x1]
        %v215 = vld [vmem:[#allocation7 + $0x1] sm:$0x1]
        %v216 = vld [vmem:[#allocation7 + $0x2] sm:$0x1]
        %v217 = vld [vmem:[#allocation7 + $0x3] sm:$0x1]
        %v218 = vld [vmem:[#allocation7 + $0x4] sm:$0x1]
        %vm219 = vcmask 261120
        %v220 = vsel %vm219, %v213, 0.0
        %221 = vadd.xlane.f32.xlu0 %v220
        %v222 = vpop.xlane.xlu0 %221
        %v223 = vrcp.pop 32.0
        %v224 = vmul.f32 %v222, %v223
        %v225 = vsub.f32 %v213, %v224
        %v226 = vmul.f32 %v225, %v225
        %v227 = vsel %vm219, %v226, 0.0
        %228 = vadd.xlane.f32.xlu0 %v227
        %v229 = vpop.xlane.xlu0 %228
        %v230 = vmul.f32 %v229, %v223
        %v231 = vadd.f32 %v230, 1e-05
        %v232 = vrsqrt.pop %v231
        %v233 = vmul.f32 %v225, %v232
        %v234 = vlaneseq
        %v235 = vshrl.u32 %v234, 7
        %v236 = vsub.s32 0, %v235
        %v237 = vrot.slane %v215, %v236
        %v238 = vmul.f32 %v233, %v237
        %v239 = vlaneseq
        %v240 = vshrl.u32 %v239, 7
        %v241 = vsub.s32 0, %v240
        %v242 = vrot.slane %v216, %v241
        %v243 = vadd.f32 %v238, %v242
        %v244 = vld [vmem:[#allocation5] sm:$0xff]
        %v245 = vld [vmem:[#allocation5 + $0x8] sm:$0xff]
        %v246 = vld [vmem:[#allocation5 + $0x10] sm:$0xff]
        %v247 = vld [vmem:[#allocation5 + $0x18] sm:$0xff]
        %v248 = vlaneseq
        %v249 = vshrl.u32 %v248, 7
        %v250 = vsub.s32 0, %v249
        %v251 = vrot.slane %v214, %v250
        %v253 = vsel %vm219, %v243, 0
        %255 = vmatprep.subr.mxu0 0.0
        %256 = vmatpush1.msra.mxu0 %v244
        %257 = vmatprep.subr.mxu0 0.0
        %258 = vmatpush1.msra.mxu0 %v245
        %259 = vmatprep.subr.mxu0 0.0
        %260 = vmatpush1.msra.mxu0 %v246
        %261 = vmatprep.subr.mxu0 0.0
        %262 = vmatpush1.msra.mxu0 %v247
        %263 = vmatprep.subr.mxu0 0.0
        %264 = vmatpush1.msra.mxu0 0.0
        %265 = vmatprep.subr.mxu0 0.0
        %266 = vmatpush1.msra.mxu0 0.0
        %267 = vmatprep.subr.mxu0 0.0
        %268 = vmatpush1.msra.mxu0 0.0
        %269 = vmatprep.subr.mxu0 0.0
        %270 = vmatpush1.msra.mxu0 0.0
        %271 = vmatprep.subr.mxu0 0.0
        %272 = vmatpush1.msra.mxu0 0.0
        %273 = vmatprep.subr.mxu0 0.0
        %274 = vmatpush1.msra.mxu0 0.0
        %275 = vmatprep.subr.mxu0 0.0
        %276 = vmatpush1.msra.mxu0 0.0
        %277 = vmatprep.subr.mxu0 0.0
        %278 = vmatpush1.msra.mxu0 0.0
        %279 = vmatprep.subr.mxu0 0.0
        %280 = vmatpush1.msra.mxu0 0.0
        %281 = vmatprep.subr.mxu0 0.0
        %282 = vmatpush1.msra.mxu0 0.0
        %283 = vmatprep.subr.mxu0 0.0
        %284 = vmatpush1.msra.mxu0 0.0
        %285 = vmatprep.subr.mxu0 0.0
        %286 = vmatpush1.msra.mxu0 0.0
        %287 = vmatprep.subr.mxu0 0.0
        %288 = vmatpush1.msra.mxu0 0.0
        %289 = vmatprep.subr.mxu0 0.0
        %290 = vmatpush1.msra.mxu0 0.0
        %291 = vmatprep.subr.mxu0 0.0
        %292 = vmatpush1.msra.mxu0 0.0
        %293 = vmatprep.subr.mxu0 0.0
        %294 = vmatpush1.msra.mxu0 0.0
        %295 = vmatprep.subr.mxu0 0.0
        %296 = vmatpush1.msra.mxu0 0.0
        %297 = vmatprep.subr.mxu0 0.0
        %298 = vmatpush1.msra.mxu0 0.0
        %299 = vmatprep.subr.mxu0 0.0
        %300 = vmatpush1.msra.mxu0 0.0
        %301 = vmatprep.subr.mxu0 0.0
        %302 = vmatpush1.msra.mxu0 0.0
        %303 = vmatprep.subr.mxu0 0.0
        %304 = vmatpush1.msra.mxu0 0.0
        %305 = vmatprep.subr.mxu0 0.0
        %306 = vmatpush1.msra.mxu0 0.0
        %307 = vmatprep.subr.mxu0 0.0
        %308 = vmatpush1.msra.mxu0 0.0
        %309 = vmatprep.subr.mxu0 0.0
        %310 = vmatpush1.msra.mxu0 0.0
        %311 = vmatprep.subr.mxu0 0.0
        %312 = vmatpush1.msra.mxu0 0.0
        %313 = vmatprep.subr.mxu0 0.0
        %314 = vmatpush1.msra.mxu0 0.0
        %315 = vmatprep.subr.mxu0 0.0
        %316 = vmatpush1.msra.mxu0 0.0
        %317 = vmatprep.subr.mxu0 0.0
        %318 = vmatpush1.msra.mxu0 0.0
        %319 = vmatprep.mubr.f32.mxu0 0.0
        %320 = vmatmul.mubr.f32.gmra.mrb[0].mxu0 %v253
        %v321 = vpop.f32.mrb[0].mxu0
        %v322 = vadd.f32 %v251, %v321
        %v323 = vpop.f32.mrb[0].mxu0
        %324 = vdwg.mxu0
        %v325 = vmul.f32 %v322, 0.5
        %v326 = vmul.f32 %v322, 0.70710677
        %v327 = verf.f32.pop %v326
        %v328 = vadd.f32 %v327, 1.0
        %v329 = vmul.f32 %v325, %v328
        %v330 = vsel %vm219, %v329, 0.0
        %331 = vadd.xlane.f32.xlu0 %v330
        %v332 = vpop.xlane.xlu0 %331
        %v333 = vmul.f32 %v332, %v223
        %v334 = vsub.f32 %v329, %v333
        %v335 = vmul.f32 %v334, %v334
        %v336 = vsel %vm219, %v335, 0.0
        %337 = vadd.xlane.f32.xlu0 %v336
        %v338 = vpop.xlane.xlu0 %337
        %v339 = vmul.f32 %v338, %v223
        %v340 = vadd.f32 %v339, 1e-05
        %v341 = vrsqrt.pop %v340
        %v342 = vmul.f32 %v334, %v341
        %v343 = vlaneseq
        %v344 = vshrl.u32 %v343, 7
        %v345 = vsub.s32 0, %v344
        %v346 = vrot.slane %v217, %v345
        %v347 = vmul.f32 %v342, %v346
        %v348 = vlaneseq
        %v349 = vshrl.u32 %v348, 7
        %v350 = vsub.s32 0, %v349
        %v351 = vrot.slane %v218, %v350
        %v352 = vadd.f32 %v347, %v351
        %353 = vst.msk [vmem:[%s212] sm:$0xff] %vm219, %v352
        %s354 = sand.u32 %s97, 1
        %s355 = scalar_lea.sflag [#allocation4], %s354
        %s356 = sand.u32 %s97, 1
        %s357 = smul.addr %s356, 8
        %s358 = scalar_lea.vmem [#allocation8], %s357
        // Predicated region
        $region45: #{tpu_custom_call.1} parent=31 // pred_check
          %p359 = pneg %p107
        $region46: #{tpu_custom_call.1} parent=31 // pred_check_branch
          %361 = sbr.rel (%p359) target = $region48
        $region47: #{tpu_custom_call.1} parent=31 // pred_region
          %s363 = ssub.s32 128, 128
          %364 = vsyncadd %s355, %s363
          %s365 = smul.addr %s21, 128
          %s366 = scalar_lea.hbm %s3, %s365
          %s368 = sshll.u32 %s358, 4
          %s369 = int_to_ptr.vmem [resolvable:$true] %s368
          %371 = dma.vmem_to_hbm [thread:$0]  %s369, 128, %s366, %s355
        $region48: #{tpu_custom_call.1} parent=31 // pred_fallthru
          _
      $region32: #{tpu_custom_call.1} parent=5 // pred_fallthru
        _
      %p372 = scmp.le.s32.totalorder 2, %s16
      // Predicated region
      $region49: #{tpu_custom_call.1} parent=5 // pred_check
        %p373 = pneg %p372
      $region50: #{tpu_custom_call.1} parent=5 // pred_check_branch
        %375 = sbr.rel (%p373) target = $region52
      $region51: #{tpu_custom_call.1} parent=5 // pred_region
        %s376 = ssub.s32 %s16, 2
        // Predicated region
        $region53: #{tpu_custom_call.1} parent=51 // pred_check
          %p377 = pneg %p113
        $region54: #{tpu_custom_call.1} parent=51 // pred_check_branch
          %379 = sbr.rel (%p377) target = $region56
        $region55: #{tpu_custom_call.1} parent=51 // pred_region
          %s380 = sand.u32 %s98, 1
          %s381 = scalar_lea.sflag [#allocation4], %s380
          %s382 = sand.u32 %s98, 1
          %s383 = smul.addr %s382, 8
          %s384 = scalar_lea.vmem [#allocation8], %s383
          %385 = dma.done %s381, 128
        $region56: #{tpu_custom_call.1} parent=51 // pred_fallthru
          _
      $region52: #{tpu_custom_call.1} parent=5 // pred_fallthru
        _
    $region6: #{tpu_custom_call.1} parent=1 // loop_footer
      %s20 = sadd.s32 1, %s16
    $region7: #{tpu_custom_call.1} parent=1 // loop_footer_branch
      %15 = sbr.rel target = $region3
    $region8: #{tpu_custom_call.1} parent=1 // loop_exit
      _
    %386 = vsyncpa [#allocation3], 1
    %s387 = scalar_lea.sflag [#allocation3], 1
    %388 = vsyncpa %s387, 1
    %389 = vsyncpa [#allocation6], 1
    %390 = vsyncpa [#allocation4], 1
    %s391 = scalar_lea.sflag [#allocation4], 1
    %392 = vsyncpa %s391, 1

</llo_original>
